<compile_context>
chip_gen: v5e
topology: v5e:2x2
jax: 0.10.0
libtpu: 0.0.40
codegen_flags: <defaults>
</compile_context>

<pallas_src>
import functools

import jax
import jax.numpy as jnp
from jax.experimental import pallas as pl
from jax.experimental.pallas import tpu as pltpu


def _round_up(v, m):
    return (v + m - 1) // m * m


def gating_kernel(x_ref, w1_ref, b1_ref, w2_ref, b2_ref,
                  out_ref, gates_ref, logits_ref, acc_ref, *, compute_dtype):
    k = pl.program_id(1)

    @pl.when(k == 0)
    def _():
        acc_ref[...] = jnp.zeros_like(acc_ref)

    x = x_ref[...]                                         # [TB, Dp]
    xm = x.astype(compute_dtype)

    # Linear 1 + tanh for this hidden slab (MXU matmul, f32 accumulate).
    h = jnp.tanh(
        jnp.dot(xm, w1_ref[...], preferred_element_type=jnp.float32)
        + b1_ref[...].astype(jnp.float32)
    )                                                      # [TB, TH] f32

    # Partial contribution of Linear 2 (contract over this hidden slab).
    acc_ref[...] += jnp.dot(h.astype(compute_dtype), w2_ref[...],
                            preferred_element_type=jnp.float32)

    @pl.when(k == pl.num_programs(1) - 1)
    def _():
        logits = jnp.tanh(acc_ref[...] + b2_ref[...].astype(jnp.float32))
        # HardThresholding in eval mode: noise * training == 0.
        # TODO(synk): training-mode Gaussian noise would need pltpu.prng_seed +
        # pltpu.stateful_normal; eval-mode semantics only here.
        gates = jnp.clip(logits + 0.5, 0.0, 1.0)
        logits_ref[...] = logits.astype(logits_ref.dtype)
        gates_ref[...] = gates.astype(gates_ref.dtype)
        out_ref[...] = (x.astype(jnp.float32) * gates).astype(out_ref.dtype)


def _vmem_budgets():
    """Generation-aware (capacity, scoped-limit, tile-budget) in bytes."""
    try:
        cap = int(pltpu.get_tpu_info().vmem_capacity_bytes)
    except Exception:
        cap = 64 * 1024 * 1024      # conservative fallback (v7x-sized)
    limit = int(cap * 0.55)         # scoped VMEM we request from the compiler
    budget = int(limit * 0.85)      # what the tile chooser may actually spend
    return cap, limit, budget


def _choose_tiles(batch, d_pad, h_pad, io_bytes, w_bytes, out_bytes, act_bytes,
                  budget_bytes, max_tile=512):
    """Pick (batch_tile, hidden_tile, padded_hidden) fitting the VMEM budget."""
    bias_bytes = 2 * (h_pad + d_pad) * 4

    def weight_bytes(th):
        # Weight slabs are double-buffered by the BlockSpec pipeline when the
        # hidden axis is tiled; count 2x to stay safe (budget is generous now).
        return 2 * (2 * d_pad * th * w_bytes) + 2 * bias_bytes

    weight_budget = int(budget_bytes * 0.6)
    if weight_bytes(h_pad) <= weight_budget:
        th = h_pad                              # fully resident weights
    else:
        n128 = max(1, weight_budget // max(weight_bytes(128), 1))
        th = max(128, int(n128) * 128)          # hidden-tiled fallback
    th = min(th, h_pad)
    h_pad2 = _round_up(h_pad, th)

    remaining = max(budget_bytes - weight_bytes(th), 0)
    per_row = (2 * d_pad * io_bytes                      # x tile (2 buffers)
               + 2 * d_pad * (out_bytes + 2 * act_bytes) # out/gates/logits (2 bufs)
               + d_pad * 4                               # f32 accumulator scratch
               + th * (4 + w_bytes)                      # h temporary (+cast copy)
               + d_pad * (8 + w_bytes))                  # logits/gates/x temporaries
    tb = remaining // per_row
    tb = max(8, min(max_tile, (tb // 8) * 8))
    b_ceil = _round_up(batch, 8)
    tb = min(tb, b_ceil)
    # v7x has two TensorCores: give the "parallel" batch axis >=2 steps when the
    # batch is big enough to split. Harmless on v5e/v6e.
    if tb >= b_ceil and b_ceil >= 16:
        tb = _round_up((b_ceil + 1) // 2, 8)
    return tb, th, h_pad2


def gating_nn_forward(x, w1, b1, w2, b2, *, use_bf16_matmul=True,
                      acts_dtype=None, block_batch=None, block_hidden=None,
                      feature_align=128):
    """x: [B, D]; w1: [D, H]; b1: [1, H]; w2: [H, D]; b2: [1, D].

    Weights are pre-transposed ([in, out]) so the kernel does x @ W, equivalent
    to PyTorch's x @ W.T. Returns (x * gates, gates, logits).

    use_bf16_matmul=True (default) is the fast MXU path (bf16 operands, f32
    accumulation). Set False for bit-exact f32 matmuls.
    gates/logits are returned in `acts_dtype` (default: x.dtype).
    """
    B, D = x.shape
    H = w1.shape[1]
    compute_dtype = jnp.bfloat16 if use_bf16_matmul else jnp.float32
    acts_dtype = x.dtype if acts_dtype is None else acts_dtype

    # Lane-dense feature dims (zero padding is numerically exact; padded rows/
    # cols are sliced off below). feature_align=256 can help when MXU-bound on
    # v6e/v7x with large dims; 128 avoids padded-FLOP waste for small dims.
    Dp = _round_up(D, feature_align)
    Hp = _round_up(H, feature_align)

    io_bytes = jnp.dtype(x.dtype).itemsize
    w_bytes = jnp.dtype(compute_dtype).itemsize
    out_bytes = jnp.dtype(x.dtype).itemsize
    act_bytes = jnp.dtype(acts_dtype).itemsize

    cap, vmem_limit, budget = _vmem_budgets()
    auto_tb, auto_th, Hp2 = _choose_tiles(
        B, Dp, Hp, io_bytes, w_bytes, out_bytes, act_bytes, budget)

    TB = auto_tb if block_batch is None else max(8, _round_up(block_batch, 8))
    TH = auto_th if block_hidden is None else max(128, _round_up(block_hidden, 128))
    TH = min(TH, _round_up(Hp, 128))
    Hp2 = _round_up(Hp, TH)
    Bp = _round_up(B, TB)
    # TODO(synk): if Dp itself is too wide to keep a (Dp x TH) weight slab plus
    # a (TB x Dp) row tile in VMEM, a D-tiled (second contraction) variant is
    # needed; not implemented here.

    def pad2(a, rows, cols):
        pr, pc = rows - a.shape[0], cols - a.shape[1]
        if pr or pc:
            a = jnp.pad(a, ((0, pr), (0, pc)))
        return a

    xp = pad2(x, Bp, Dp)
    w1p = pad2(w1, Dp, Hp2).astype(compute_dtype)
    b1p = pad2(b1, 1, Hp2).astype(jnp.float32)
    w2p = pad2(w2, Hp2, Dp).astype(compute_dtype)
    b2p = pad2(b2, 1, Dp).astype(jnp.float32)

    grid = (Bp // TB, Hp2 // TH)

    row_spec = lambda: pl.BlockSpec((TB, Dp), lambda i, k: (i, 0))

    in_specs = [
        row_spec(),                                          # x
        pl.BlockSpec((Dp, TH), lambda i, k: (0, k)),          # w1 slab
        pl.BlockSpec((1, TH), lambda i, k: (0, k)),           # b1 slab
        pl.BlockSpec((TH, Dp), lambda i, k: (k, 0)),          # w2 slab
        pl.BlockSpec((1, Dp), lambda i, k: (0, 0)),           # b2 (resident)
    ]
    out_specs = (row_spec(), row_spec(), row_spec())

    out_shapes = (
        jax.ShapeDtypeStruct((Bp, Dp), x.dtype),      # X * gates
        jax.ShapeDtypeStruct((Bp, Dp), acts_dtype),   # gates
        jax.ShapeDtypeStruct((Bp, Dp), acts_dtype),   # logits
    )

    cost = pl.CostEstimate(
        flops=int(4 * Bp * Dp * Hp2),
        transcendentals=int(Bp * (Hp2 + Dp)),
        bytes_accessed=int(Bp * Dp * io_bytes
                           + (Bp // TB) * 2 * Dp * Hp2 * w_bytes
                           + 4 * (Hp2 + Dp)
                           + Bp * Dp * (out_bytes + 2 * act_bytes)),
    )

    out, gates, logits = pl.pallas_call(
        functools.partial(gating_kernel, compute_dtype=compute_dtype),
        out_shape=out_shapes,
        grid=grid,
        in_specs=in_specs,
        out_specs=out_specs,
        scratch_shapes=[pltpu.VMEM((TB, Dp), jnp.float32)],
        compiler_params=pltpu.CompilerParams(
            dimension_semantics=("parallel", "arbitrary"),
            vmem_limit_bytes=int(vmem_limit)),
        cost_estimate=cost,
    )(xp, w1p, b1p, w2p, b2p)

    return out[:B, :D], gates[:B, :D], logits[:B, :D]


def init_params(key, input_dim, hidden_dim, dtype=jnp.float32):
    """Matches init_weights_normal: weights ~ N(0, 0.001), biases = 0."""
    k1, k2 = jax.random.split(key)
    # PyTorch weight is [out, in]; store transposed [in, out] for x @ W.
    w1 = jax.random.normal(k1, (input_dim, hidden_dim), dtype) * 0.001
    b1 = jnp.zeros((1, hidden_dim), dtype)
    w2 = jax.random.normal(k2, (hidden_dim, input_dim), dtype) * 0.001
    b2 = jnp.zeros((1, input_dim), dtype)
    return w1, b1, w2, b2


def reference_forward(x, w1, b1, w2, b2):
    h = jnp.tanh(x @ w1 + b1)
    logits = jnp.tanh(h @ w2 + b2)
    gates = jnp.clip(logits + 0.5, 0.0, 1.0)
    return x * gates, gates, logits


if __name__ == "__main__":
    # Small shapes consistent with the module.
    batch, input_dim, hidden_dim = 8, 16, 32

    key = jax.random.PRNGKey(0)
    kx, kp = jax.random.split(key)
    x = jax.random.normal(kx, (batch, input_dim), jnp.float32)
    w1, b1, w2, b2 = init_params(kp, input_dim, hidden_dim)

    ref_out, ref_gates, ref_logits = reference_forward(x, w1, b1, w2, b2)

    # Default fast path: bf16 MXU operands, f32 accumulation (looser tolerance).
    out, gates, logits = gating_nn_forward(x, w1, b1, w2, b2)
    jax.block_until_ready((out, gates, logits))
    assert jnp.allclose(out, ref_out, atol=2e-2, rtol=2e-2)
    assert jnp.allclose(gates, ref_gates, atol=2e-2, rtol=2e-2)
    assert jnp.allclose(logits, ref_logits, atol=2e-2, rtol=2e-2)

    # Exact f32 path.
    out_f, gates_f, logits_f = gating_nn_forward(x, w1, b1, w2, b2,
                                                 use_bf16_matmul=False)
    jax.block_until_ready((out_f, gates_f, logits_f))
    assert jnp.allclose(out_f, ref_out, atol=1e-5)
    assert jnp.allclose(gates_f, ref_gates, atol=1e-5)
    assert jnp.allclose(logits_f, ref_logits, atol=1e-5)

    # Exercise the batch-tiled grid, hidden-dim (K) tiling, and non-aligned
    # padding path, with the exact f32 matmul so the tiled accumulation can be
    # checked against the reference at tight tolerance.
    kx2, kp2 = jax.random.split(jax.random.PRNGKey(1))
    x2 = jax.random.normal(kx2, (200, 130), jnp.float32)
    params2 = init_params(kp2, 130, 300)
    out2, gates2, logits2 = gating_nn_forward(
        x2, *params2, use_bf16_matmul=False, block_batch=64, block_hidden=128)
    jax.block_until_ready((out2, gates2, logits2))
    r_out2, r_gates2, r_logits2 = reference_forward(x2, *params2)
    assert jnp.allclose(out2, r_out2, atol=1e-5)
    assert jnp.allclose(gates2, r_gates2, atol=1e-5)
    assert jnp.allclose(logits2, r_logits2, atol=1e-5)

    # Same shapes through the default bf16 fast path (looser tolerance).
    out3, gates3, logits3 = gating_nn_forward(
        x2, *params2, block_batch=64, block_hidden=128)
    jax.block_until_ready((out3, gates3, logits3))
    assert jnp.allclose(out3, r_out2, atol=2e-2, rtol=2e-2)
    assert jnp.allclose(gates3, r_gates2, atol=2e-2, rtol=2e-2)
    assert jnp.allclose(logits3, r_logits2, atol=2e-2, rtol=2e-2)

    print("KERNEL_OK")
</pallas_src>

<mosaic_0001>
module attributes {stable_mosaic.version = 11 : i64} {
  func.func @gating_kernel(%arg0: i32, %arg1: i32, %arg2: memref<8x128xf32, #tpu.memory_space<vmem>>, %arg3: memref<128x128xbf16, #tpu.memory_space<vmem>>, %arg4: memref<1x128xf32, #tpu.memory_space<vmem>>, %arg5: memref<128x128xbf16, #tpu.memory_space<vmem>>, %arg6: memref<1x128xf32, #tpu.memory_space<vmem>>, %arg7: memref<8x128xf32, #tpu.memory_space<vmem>>, %arg8: memref<8x128xf32, #tpu.memory_space<vmem>>, %arg9: memref<8x128xf32, #tpu.memory_space<vmem>>, %arg10: memref<8x128xf32, #tpu.memory_space<vmem>>) attributes {dimension_semantics = [#tpu.dimension_semantics<parallel>, #tpu.dimension_semantics<arbitrary>], iteration_bounds = array<i64: 1, 1>, scalar_prefetch = 0 : i64, scratch_operands = 1 : i64, tpu.core_type = #tpu.core_type<tc>, window_params = [{transform_indices = @transform_0, window_bounds = array<i64: 8, 128>}, {transform_indices = @transform_1, window_bounds = array<i64: 128, 128>}, {transform_indices = @transform_2, window_bounds = array<i64: 1, 128>}, {transform_indices = @transform_3, window_bounds = array<i64: 128, 128>}, {pipeline_mode = #tpu.pipeline_mode<synchronous>, transform_indices = @transform_4, window_bounds = array<i64: 1, 128>}, {transform_indices = @transform_5, window_bounds = array<i64: 8, 128>}, {transform_indices = @transform_6, window_bounds = array<i64: 8, 128>}, {transform_indices = @transform_7, window_bounds = array<i64: 8, 128>}]} {
    %c0_i32 = arith.constant 0 : i32
    %0 = arith.cmpi eq, %arg1, %c0_i32 : i32
    %1 = arith.extui %0 : i1 to i32
    %c0_i32_0 = arith.constant 0 : i32
    %2 = arith.cmpi ne, %1, %c0_i32_0 : i32
    scf.if %2 {
      %cst_15 = arith.constant 0.000000e+00 : f32
      %20 = vector.broadcast %cst_15 : f32 to vector<8x128xf32>
      %c0_16 = arith.constant 0 : index
      %c0_17 = arith.constant 0 : index
      %21 = vector.load %arg10[%c0_16, %c0_17] : memref<8x128xf32, #tpu.memory_space<vmem>>, vector<8x128xf32>
      tpu.vector_store %arg10[%c0_16, %c0_17], %20 {strides = array<i32>} : memref<8x128xf32, #tpu.memory_space<vmem>>, vector<8x128xf32>,
    } else {
    }
    %c0 = arith.constant 0 : index
    %c0_1 = arith.constant 0 : index
    %3 = vector.load %arg2[%c0, %c0_1] : memref<8x128xf32, #tpu.memory_space<vmem>>, vector<8x128xf32>
    %4 = arith.truncf %3 : vector<8x128xf32> to vector<8x128xbf16>
    %c0_2 = arith.constant 0 : index
    %c0_3 = arith.constant 0 : index
    %5 = vector.load %arg3[%c0_2, %c0_3] : memref<128x128xbf16, #tpu.memory_space<vmem>>, vector<128x128xbf16>
    %cst = arith.constant dense<0.000000e+00> : vector<8x128xf32>
    %6 = tpu.matmul %4, %5, %cst {dimension_numbers = #tpu.dot_dimension_numbers<[1], [0], [0], [1], [0, 0, 1, 1], [], []>} : vector<8x128xbf16>, vector<128x128xbf16>, vector<8x128xf32> -> vector<8x128xf32>
    %c0_4 = arith.constant 0 : index
    %c0_5 = arith.constant 0 : index
    %7 = vector.load %arg4[%c0_4, %c0_5] : memref<1x128xf32, #tpu.memory_space<vmem>>, vector<1x128xf32>
    %8 = vector.broadcast %7 : vector<1x128xf32> to vector<8x128xf32>
    %9 = arith.addf %6, %8 : vector<8x128xf32>
    %10 = math.tanh %9 : vector<8x128xf32>
    %c0_6 = arith.constant 0 : index
    %c0_7 = arith.constant 0 : index
    %11 = vector.load %arg10[%c0_6, %c0_7] : memref<8x128xf32, #tpu.memory_space<vmem>>, vector<8x128xf32>
    %12 = arith.truncf %10 : vector<8x128xf32> to vector<8x128xbf16>
    %c0_8 = arith.constant 0 : index
    %c0_9 = arith.constant 0 : index
    %13 = vector.load %arg5[%c0_8, %c0_9] : memref<128x128xbf16, #tpu.memory_space<vmem>>, vector<128x128xbf16>
    %cst_10 = arith.constant dense<0.000000e+00> : vector<8x128xf32>
    %14 = tpu.matmul %12, %13, %cst_10 {dimension_numbers = #tpu.dot_dimension_numbers<[1], [0], [0], [1], [0, 0, 1, 1], [], []>} : vector<8x128xbf16>, vector<128x128xbf16>, vector<8x128xf32> -> vector<8x128xf32>
    %15 = arith.addf %11, %14 : vector<8x128xf32>
    %c0_11 = arith.constant 0 : index
    %c0_12 = arith.constant 0 : index
    %16 = vector.load %arg10[%c0_11, %c0_12] : memref<8x128xf32, #tpu.memory_space<vmem>>, vector<8x128xf32>
    tpu.vector_store %arg10[%c0_11, %c0_12], %15 {strides = array<i32>} : memref<8x128xf32, #tpu.memory_space<vmem>>, vector<8x128xf32>,
    %c0_i32_13 = arith.constant 0 : i32
    %17 = arith.cmpi eq, %arg1, %c0_i32_13 : i32
    %18 = arith.extui %17 : i1 to i32
    %c0_i32_14 = arith.constant 0 : i32
    %19 = arith.cmpi ne, %18, %c0_i32_14 : i32
    scf.if %19 {
      %c0_15 = arith.constant 0 : index
      %c0_16 = arith.constant 0 : index
      %20 = vector.load %arg10[%c0_15, %c0_16] : memref<8x128xf32, #tpu.memory_space<vmem>>, vector<8x128xf32>
      %c0_17 = arith.constant 0 : index
      %c0_18 = arith.constant 0 : index
      %21 = vector.load %arg6[%c0_17, %c0_18] : memref<1x128xf32, #tpu.memory_space<vmem>>, vector<1x128xf32>
      %22 = vector.broadcast %21 : vector<1x128xf32> to vector<8x128xf32>
      %23 = arith.addf %20, %22 : vector<8x128xf32>
      %24 = math.tanh %23 : vector<8x128xf32>
      %cst_19 = arith.constant 5.000000e-01 : f32
      %25 = vector.broadcast %cst_19 : f32 to vector<8x128xf32>
      %26 = arith.addf %24, %25 : vector<8x128xf32>
      %cst_20 = arith.constant 0.000000e+00 : f32
      %cst_21 = arith.constant 1.000000e+00 : f32
      %27 = vector.broadcast %cst_20 : f32 to vector<8x128xf32>
      %28 = arith.maximumf %27, %26 : vector<8x128xf32>
      %29 = vector.broadcast %cst_21 : f32 to vector<8x128xf32>
      %30 = arith.minimumf %29, %28 : vector<8x128xf32>
      %c0_22 = arith.constant 0 : index
      %c0_23 = arith.constant 0 : index
      %31 = vector.load %arg9[%c0_22, %c0_23] : memref<8x128xf32, #tpu.memory_space<vmem>>, vector<8x128xf32>
      tpu.vector_store %arg9[%c0_22, %c0_23], %24 {strides = array<i32>} : memref<8x128xf32, #tpu.memory_space<vmem>>, vector<8x128xf32>,
      %c0_24 = arith.constant 0 : index
      %c0_25 = arith.constant 0 : index
      %32 = vector.load %arg8[%c0_24, %c0_25] : memref<8x128xf32, #tpu.memory_space<vmem>>, vector<8x128xf32>
      tpu.vector_store %arg8[%c0_24, %c0_25], %30 {strides = array<i32>} : memref<8x128xf32, #tpu.memory_space<vmem>>, vector<8x128xf32>,
      %33 = arith.mulf %3, %30 : vector<8x128xf32>
      %c0_26 = arith.constant 0 : index
      %c0_27 = arith.constant 0 : index
      %34 = vector.load %arg7[%c0_26, %c0_27] : memref<8x128xf32, #tpu.memory_space<vmem>>, vector<8x128xf32>
      tpu.vector_store %arg7[%c0_26, %c0_27], %33 {strides = array<i32>} : memref<8x128xf32, #tpu.memory_space<vmem>>, vector<8x128xf32>,
    } else {
    }
    return
  }
  func.func @transform_0(%arg0: i32, %arg1: i32) -> (i32, i32) {
    %c0_i32 = arith.constant 0 : i32
    %c0_i32_0 = arith.constant 0 : i32
    return %arg0, %c0_i32 : i32, i32
  }
  func.func @transform_1(%arg0: i32, %arg1: i32) -> (i32, i32) {
    %c0_i32 = arith.constant 0 : i32
    %c0_i32_0 = arith.constant 0 : i32
    return %c0_i32, %arg1 : i32, i32
  }
  func.func @transform_2(%arg0: i32, %arg1: i32) -> (i32, i32) {
    %c0_i32 = arith.constant 0 : i32
    %c0_i32_0 = arith.constant 0 : i32
    return %c0_i32, %arg1 : i32, i32
  }
  func.func @transform_3(%arg0: i32, %arg1: i32) -> (i32, i32) {
    %c0_i32 = arith.constant 0 : i32
    %c0_i32_0 = arith.constant 0 : i32
    return %arg1, %c0_i32 : i32, i32
  }
  func.func @transform_4(%arg0: i32, %arg1: i32) -> (i32, i32) {
    %c0_i32 = arith.constant 0 : i32
    %c0_i32_0 = arith.constant 0 : i32
    %c0_i32_1 = arith.constant 0 : i32
    return %c0_i32, %c0_i32_0 : i32, i32
  }
  func.func @transform_5(%arg0: i32, %arg1: i32) -> (i32, i32) {
    %c0_i32 = arith.constant 0 : i32
    %c0_i32_0 = arith.constant 0 : i32
    return %arg0, %c0_i32 : i32, i32
  }
  func.func @transform_6(%arg0: i32, %arg1: i32) -> (i32, i32) {
    %c0_i32 = arith.constant 0 : i32
    %c0_i32_0 = arith.constant 0 : i32
    return %arg0, %c0_i32 : i32, i32
  }
  func.func @transform_7(%arg0: i32, %arg1: i32) -> (i32, i32) {
    %c0_i32 = arith.constant 0 : i32
    %c0_i32_0 = arith.constant 0 : i32
    return %arg0, %c0_i32 : i32, i32
  }
}

</mosaic_0001>

<llo_original>
// kernel: tpu_custom_call.1
$region0: #{tpu_custom_call.1}
  #allocation0 [shape = 'u32[]', space=smem, size = 0x4, offset = 0x4, fixed_abs, tag = 'smem constant byte address 0x4 - core index']
  #allocation1 [shape = 'u32[72,128]{1,0:T(1,128)}', space=vmem, size = 0x9000, scoped, tag = 'internal scratch']
  #allocation2 [shape = 'f32[8,128]{1,0:T(8,128)}', space=vmem, size = 0x1000, scoped, tag = 'scratch operand']
  %s0 = inlined_call_operand.hbm [shape: f32[8,128], index: 0, kind: input, shape index: {}]
  %s1 = inlined_call_operand.hbm [shape: bf16[128,128], index: 1, kind: input, shape index: {}]
  %s2 = inlined_call_operand.vmem [shape: f32[1,128], index: 2, kind: input, shape index: {}]
  %s3 = inlined_call_operand.hbm [shape: bf16[128,128], index: 3, kind: input, shape index: {}]
  %s4 = inlined_call_operand.vmem [shape: f32[1,128], index: 4, kind: input, shape index: {}]
  %s5 = inlined_call_operand.hbm [shape: f32[8,128], index: 5, kind: output, shape index: {0}]
  %s6 = inlined_call_operand.hbm [shape: f32[8,128], index: 6, kind: output, shape index: {1}]
  %s7 = inlined_call_operand.hbm [shape: f32[8,128], index: 7, kind: output, shape index: {2}]
  %8 = xla_tuple %s5, %s6, %s7
  %s9 = sld [smem:[#allocation0]]
  $region66: #{tpu_custom_call.1} parent=0
    _
  %s11 = ssub.s32 1, %s9
  %s12 = scalar_select 0, %s11, %s9
  $region1: #{tpu_custom_call.1} parent=0
    #allocation3 [shape = 'u8[4096]{0}', space=vmem, size = 0x1000, scoped, tag = 'input window, operand 0, single buffered']
    #allocation4 [shape = 's32[1]{0}', space=sflag, size = 0x4, scoped, tag = 'scoped memory for tpu_custom_call.1']
    #allocation5 [shape = 's32[1]{0}', space=sflag, size = 0x4, scoped, tag = 'scoped memory for tpu_custom_call.1']
    #allocation6 [shape = 'u8[32768]{0}', space=vmem, size = 0x8000, scoped, tag = 'input window, operand 1, single buffered']
    #allocation7 [shape = 's32[1]{0}', space=sflag, size = 0x4, scoped, tag = 'scoped memory for tpu_custom_call.1']
    #allocation8 [shape = 'u8[32768]{0}', space=vmem, size = 0x8000, scoped, tag = 'input window, operand 3, single buffered']
    #allocation9 [shape = 'u8[4096]{0}', space=vmem, size = 0x1000, scoped, tag = 'output window, operand 0, single buffered']
    #allocation10 [shape = 'u8[4096]{0}', space=vmem, size = 0x1000, scoped, tag = 'output window, operand 1, single buffered']
    #allocation11 [shape = 's32[1]{0}', space=sflag, size = 0x4, scoped, tag = 'scoped memory for tpu_custom_call.1']
    #allocation12 [shape = 'u8[4096]{0}', space=vmem, size = 0x1000, scoped, tag = 'output window, operand 2, single buffered']
    %13 = vsyncpa [#allocation4], 0
    %14 = vsyncpa [#allocation7], 0
    %15 = vsyncpa [#allocation5], 0
    %16 = vsyncpa [#allocation11], 0
    // Predicated region
    $region2: #{tpu_custom_call.1} parent=1 // pred_check
      _
    $region3: #{tpu_custom_call.1} parent=1 // pred_check_branch
      %18 = sbr.rel (0) target = $region5
    $region4: #{tpu_custom_call.1} parent=1 // pred_region
      %20 = vsyncadd [#allocation4], 0
      %s22 = sshll.u32 %s0, 4
      %s23 = int_to_ptr.hbm [resolvable:$true] %s22
      %s24 = sshll.u32 [#allocation3], 4
      %s25 = int_to_ptr.vmem [resolvable:$true] %s24
      %27 = dma.hbm_to_vmem [thread:$0]  %s23, 128, %s25, [#allocation4]
    $region5: #{tpu_custom_call.1} parent=1 // pred_fallthru
      _
    // Predicated region
    $region6: #{tpu_custom_call.1} parent=1 // pred_check
      _
    $region7: #{tpu_custom_call.1} parent=1 // pred_check_branch
      %29 = sbr.rel (0) target = $region9
    $region8: #{tpu_custom_call.1} parent=1 // pred_region
      %31 = vsyncadd [#allocation7], 0
      %s32 = sshll.u32 %s1, 4
      %s33 = int_to_ptr.hbm [resolvable:$true] %s32
      %s34 = sshll.u32 [#allocation6], 4
      %s35 = int_to_ptr.vmem [resolvable:$true] %s34
      %40 = dma.hbm_to_vmem [thread:$0]  %s33, 1024, %s35, [#allocation7], 64, 64, 4
    $region9: #{tpu_custom_call.1} parent=1 // pred_fallthru
      _
    // Predicated region
    $region10: #{tpu_custom_call.1} parent=1 // pred_check
      _
    $region11: #{tpu_custom_call.1} parent=1 // pred_check_branch
      %42 = sbr.rel (0) target = $region13
    $region12: #{tpu_custom_call.1} parent=1 // pred_region
      _
    $region13: #{tpu_custom_call.1} parent=1 // pred_fallthru
      _
    // Predicated region
    $region14: #{tpu_custom_call.1} parent=1 // pred_check
      _
    $region15: #{tpu_custom_call.1} parent=1 // pred_check_branch
      %44 = sbr.rel (0) target = $region17
    $region16: #{tpu_custom_call.1} parent=1 // pred_region
      %46 = vsyncadd [#allocation7], 0
      %s47 = sshll.u32 %s3, 4
      %s48 = int_to_ptr.hbm [resolvable:$true] %s47
      %s49 = sshll.u32 [#allocation8], 4
      %s50 = int_to_ptr.vmem [resolvable:$true] %s49
      %55 = dma.hbm_to_vmem [thread:$0]  %s48, 1024, %s50, [#allocation7], 64, 64, 4
    $region17: #{tpu_custom_call.1} parent=1 // pred_fallthru
      _
    // Predicated region
    $region18: #{tpu_custom_call.1} parent=1 // pred_check
      _
    $region19: #{tpu_custom_call.1} parent=1 // pred_check_branch
      %57 = sbr.rel (0) target = $region21
    $region20: #{tpu_custom_call.1} parent=1 // pred_region
      _
    $region21: #{tpu_custom_call.1} parent=1 // pred_fallthru
      _
    // Predicated region
    $region22: #{tpu_custom_call.1} parent=1 // pred_check
      _
    $region23: #{tpu_custom_call.1} parent=1 // pred_check_branch
      %59 = sbr.rel (0) target = $region25
    $region24: #{tpu_custom_call.1} parent=1 // pred_region
      %61 = dma.done [#allocation4], 128
    $region25: #{tpu_custom_call.1} parent=1 // pred_fallthru
      _
    // Predicated region
    $region26: #{tpu_custom_call.1} parent=1 // pred_check
      _
    $region27: #{tpu_custom_call.1} parent=1 // pred_check_branch
      %63 = sbr.rel (0) target = $region29
    $region28: #{tpu_custom_call.1} parent=1 // pred_region
      %65 = dma.done [#allocation7], 1024
    $region29: #{tpu_custom_call.1} parent=1 // pred_fallthru
      _
    // Predicated region
    $region30: #{tpu_custom_call.1} parent=1 // pred_check
      _
    $region31: #{tpu_custom_call.1} parent=1 // pred_check_branch
      %67 = sbr.rel (0) target = $region33
    $region32: #{tpu_custom_call.1} parent=1 // pred_region
      %69 = dma.done [#allocation7], 1024
    $region33: #{tpu_custom_call.1} parent=1 // pred_fallthru
      _
    %p70 = scmp.eq.s32.totalorder 0, 0
    // Predicated region
    $region34: #{tpu_custom_call.1} parent=1 // pred_check
      %p71 = pneg %p70
    $region35: #{tpu_custom_call.1} parent=1 // pred_check_branch
      %73 = sbr.rel (%p71) target = $region37
    $region36: #{tpu_custom_call.1} parent=1 // pred_region
      %74 = vst [vmem:[#allocation2] sm:$0xff] 0.0
    $region37: #{tpu_custom_call.1} parent=1 // pred_fallthru
      _
    %v75 = vld [vmem:[#allocation3] sm:$0xff]
    %v76 = vpack.c.bf16 %v75, %v75
    %v77 = vld [vmem:[#allocation6] sm:$0xf]
    %v78 = vld [vmem:[#allocation6 + $0x4] sm:$0xf]
    %v79 = vld [vmem:[#allocation6 + $0x8] sm:$0xf]
    %v80 = vld [vmem:[#allocation6 + $0xc] sm:$0xf]
    %v81 = vld [vmem:[#allocation6 + $0x10] sm:$0xf]
    %v82 = vld [vmem:[#allocation6 + $0x14] sm:$0xf]
    %v83 = vld [vmem:[#allocation6 + $0x18] sm:$0xf]
    %v84 = vld [vmem:[#allocation6 + $0x1c] sm:$0xf]
    %v85 = vld [vmem:[#allocation6 + $0x20] sm:$0xf]
    %v86 = vld [vmem:[#allocation6 + $0x24] sm:$0xf]
    %v87 = vld [vmem:[#allocation6 + $0x28] sm:$0xf]
    %v88 = vld [vmem:[#allocation6 + $0x2c] sm:$0xf]
    %v89 = vld [vmem:[#allocation6 + $0x30] sm:$0xf]
    %v90 = vld [vmem:[#allocation6 + $0x34] sm:$0xf]
    %v91 = vld [vmem:[#allocation6 + $0x38] sm:$0xf]
    %v92 = vld [vmem:[#allocation6 + $0x3c] sm:$0xf]
    %v93 = vld [vmem:[%s2] sm:$0x1]
    %v95 = vperm.slane %v93, 0
    %v113 = vunpack.c.l.b16 %v77
    %v114 = vunpack.c.l.b16 %v78
    %v115 = vunpack.c.l.b16 %v79
    %v116 = vunpack.c.l.b16 %v80
    %v117 = vunpack.c.l.b16 %v81
    %v118 = vunpack.c.l.b16 %v82
    %v119 = vunpack.c.l.b16 %v83
    %v120 = vunpack.c.l.b16 %v84
    %v121 = vunpack.c.l.b16 %v85
    %v122 = vunpack.c.l.b16 %v86
    %v123 = vunpack.c.l.b16 %v87
    %v124 = vunpack.c.l.b16 %v88
    %v125 = vunpack.c.l.b16 %v89
    %v126 = vunpack.c.l.b16 %v90
    %v127 = vunpack.c.l.b16 %v91
    %v128 = vunpack.c.l.b16 %v92
    %v129 = vpack.c.b16 %v114, %v113
    %v130 = vpack.c.b16 %v116, %v115
    %v131 = vpack.c.b16 %v118, %v117
    %v132 = vpack.c.b16 %v120, %v119
    %v133 = vpack.c.b16 %v122, %v121
    %v134 = vpack.c.b16 %v124, %v123
    %v135 = vpack.c.b16 %v126, %v125
    %v136 = vpack.c.b16 %v128, %v127
    %145 = vmatpush.bf16.msra.mxu0 %v136
    %146 = vmatpush.bf16.msra.mxu0 %v135
    %147 = vmatpush.bf16.msra.mxu0 %v134
    %148 = vmatpush.bf16.msra.mxu0 %v133
    %149 = vmatpush.bf16.msra.mxu0 %v132
    %150 = vmatpush.bf16.msra.mxu0 %v131
    %151 = vmatpush.bf16.msra.mxu0 %v130
    %152 = vmatpush.bf16.msra.mxu0 %v129
    %153 = vmatmul.bf16.gmra.mxu0 %v76
    %v154 = vpop.f32.mrf.mxu0
    %v155 = vadd.f32 %v95, %v154
    %v156 = vpop.f32.mrf.mxu0
    %157 = vdwg.mxu0
    %v158 = vtanh.pop %v155
    %v159 = vld [vmem:[#allocation2] sm:$0xff]
    %v160 = vpack.c.bf16 %v158, %v158
    %v161 = vld [vmem:[#allocation8] sm:$0xf]
    %v162 = vld [vmem:[#allocation8 + $0x4] sm:$0xf]
    %v163 = vld [vmem:[#allocation8 + $0x8] sm:$0xf]
    %v164 = vld [vmem:[#allocation8 + $0xc] sm:$0xf]
    %v165 = vld [vmem:[#allocation8 + $0x10] sm:$0xf]
    %v166 = vld [vmem:[#allocation8 + $0x14] sm:$0xf]
    %v167 = vld [vmem:[#allocation8 + $0x18] sm:$0xf]
    %v168 = vld [vmem:[#allocation8 + $0x1c] sm:$0xf]
    %v169 = vld [vmem:[#allocation8 + $0x20] sm:$0xf]
    %v170 = vld [vmem:[#allocation8 + $0x24] sm:$0xf]
    %v171 = vld [vmem:[#allocation8 + $0x28] sm:$0xf]
    %v172 = vld [vmem:[#allocation8 + $0x2c] sm:$0xf]
    %v173 = vld [vmem:[#allocation8 + $0x30] sm:$0xf]
    %v174 = vld [vmem:[#allocation8 + $0x34] sm:$0xf]
    %v175 = vld [vmem:[#allocation8 + $0x38] sm:$0xf]
    %v176 = vld [vmem:[#allocation8 + $0x3c] sm:$0xf]
    %v193 = vunpack.c.l.b16 %v161
    %v194 = vunpack.c.l.b16 %v162
    %v195 = vunpack.c.l.b16 %v163
    %v196 = vunpack.c.l.b16 %v164
    %v197 = vunpack.c.l.b16 %v165
    %v198 = vunpack.c.l.b16 %v166
    %v199 = vunpack.c.l.b16 %v167
    %v200 = vunpack.c.l.b16 %v168
    %v201 = vunpack.c.l.b16 %v169
    %v202 = vunpack.c.l.b16 %v170
    %v203 = vunpack.c.l.b16 %v171
    %v204 = vunpack.c.l.b16 %v172
    %v205 = vunpack.c.l.b16 %v173
    %v206 = vunpack.c.l.b16 %v174
    %v207 = vunpack.c.l.b16 %v175
    %v208 = vunpack.c.l.b16 %v176
    %v209 = vpack.c.b16 %v194, %v193
    %v210 = vpack.c.b16 %v196, %v195
    %v211 = vpack.c.b16 %v198, %v197
    %v212 = vpack.c.b16 %v200, %v199
    %v213 = vpack.c.b16 %v202, %v201
    %v214 = vpack.c.b16 %v204, %v203
    %v215 = vpack.c.b16 %v206, %v205
    %v216 = vpack.c.b16 %v208, %v207
    %225 = vmatpush.bf16.msra.mxu0 %v216
    %226 = vmatpush.bf16.msra.mxu0 %v215
    %227 = vmatpush.bf16.msra.mxu0 %v214
    %228 = vmatpush.bf16.msra.mxu0 %v213
    %229 = vmatpush.bf16.msra.mxu0 %v212
    %230 = vmatpush.bf16.msra.mxu0 %v211
    %231 = vmatpush.bf16.msra.mxu0 %v210
    %232 = vmatpush.bf16.msra.mxu0 %v209
    %233 = vmatmul.bf16.gmra.mxu0 %v160
    %v234 = vpop.f32.mrf.mxu0
    %v235 = vadd.f32 0.0, %v234
    %v236 = vpop.f32.mrf.mxu0
    %237 = vdwg.mxu0
    %v238 = vadd.f32 %v159, %v235
    %239 = vst [vmem:[#allocation2] sm:$0xff] %v238
    // Predicated region
    $region38: #{tpu_custom_call.1} parent=1 // pred_check
      %p240 = pneg %p70
    $region39: #{tpu_custom_call.1} parent=1 // pred_check_branch
      %242 = sbr.rel (%p240) target = $region41
    $region40: #{tpu_custom_call.1} parent=1 // pred_region
      %v243 = vld [vmem:[#allocation2] sm:$0xff]
      %v244 = vld [vmem:[%s4] sm:$0x1]
      %v246 = vperm.slane %v244, 0
      %v248 = vadd.f32 %v243, %v246
      %v249 = vtanh.pop %v248
      %v250 = vadd.f32 %v249, 0.5
      %v251 = vmax.f32 %v250, 0.0
      %v252 = vmin.f32 %v251, 1.0
      %253 = vst [vmem:[#allocation12] sm:$0xff] %v249
      %254 = vst [vmem:[#allocation10] sm:$0xff] %v252
      %v255 = vmul.f32 %v75, %v252
      %256 = vst [vmem:[#allocation9] sm:$0xff] %v255
    $region41: #{tpu_custom_call.1} parent=1 // pred_fallthru
      _
    // Predicated region
    $region42: #{tpu_custom_call.1} parent=1 // pred_check
      _
    $region43: #{tpu_custom_call.1} parent=1 // pred_check_branch
      %258 = sbr.rel (0) target = $region45
    $region44: #{tpu_custom_call.1} parent=1 // pred_region
      %260 = vsyncadd [#allocation5], 0
      %s262 = sshll.u32 [#allocation9], 4
      %s263 = int_to_ptr.vmem [resolvable:$true] %s262
      %s264 = sshll.u32 %s5, 4
      %s265 = int_to_ptr.hbm [resolvable:$true] %s264
      %267 = dma.vmem_to_hbm [thread:$0]  %s263, 128, %s265, [#allocation5]
    $region45: #{tpu_custom_call.1} parent=1 // pred_fallthru
      _
    // Predicated region
    $region46: #{tpu_custom_call.1} parent=1 // pred_check
      _
    $region47: #{tpu_custom_call.1} parent=1 // pred_check_branch
      %269 = sbr.rel (0) target = $region49
    $region48: #{tpu_custom_call.1} parent=1 // pred_region
      %271 = vsyncadd [#allocation11], 0
      %s273 = sshll.u32 [#allocation10], 4
      %s274 = int_to_ptr.vmem [resolvable:$true] %s273
      %s275 = sshll.u32 %s6, 4
      %s276 = int_to_ptr.hbm [resolvable:$true] %s275
      %278 = dma.vmem_to_hbm [thread:$0]  %s274, 128, %s276, [#allocation11]
    $region49: #{tpu_custom_call.1} parent=1 // pred_fallthru
      _
    // Predicated region
    $region50: #{tpu_custom_call.1} parent=1 // pred_check
      _
    $region51: #{tpu_custom_call.1} parent=1 // pred_check_branch
      %280 = sbr.rel (0) target = $region53
    $region52: #{tpu_custom_call.1} parent=1 // pred_region
      %282 = vsyncadd [#allocation11], 0
      %s284 = sshll.u32 [#allocation12], 4
      %s285 = int_to_ptr.vmem [resolvable:$true] %s284
      %s286 = sshll.u32 %s7, 4
      %s287 = int_to_ptr.hbm [resolvable:$true] %s286
      %289 = dma.vmem_to_hbm [thread:$0]  %s285, 128, %s287, [#allocation11]
    $region53: #{tpu_custom_call.1} parent=1 // pred_fallthru
      _
    // Predicated region
    $region54: #{tpu_custom_call.1} parent=1 // pred_check
      _
    $region55: #{tpu_custom_call.1} parent=1 // pred_check_branch
      %291 = sbr.rel (0) target = $region57
    $region56: #{tpu_custom_call.1} parent=1 // pred_region
      %293 = dma.done [#allocation5], 128
    $region57: #{tpu_custom_call.1} parent=1 // pred_fallthru
      _
    // Predicated region
    $region58: #{tpu_custom_call.1} parent=1 // pred_check
      _
    $region59: #{tpu_custom_call.1} parent=1 // pred_check_branch
      %295 = sbr.rel (0) target = $region61
    $region60: #{tpu_custom_call.1} parent=1 // pred_region
      %297 = dma.done [#allocation11], 128
    $region61: #{tpu_custom_call.1} parent=1 // pred_fallthru
      _
    // Predicated region
    $region62: #{tpu_custom_call.1} parent=1 // pred_check
      _
    $region63: #{tpu_custom_call.1} parent=1 // pred_check_branch
      %299 = sbr.rel (0) target = $region65
    $region64: #{tpu_custom_call.1} parent=1 // pred_region
      %301 = dma.done [#allocation11], 128
    $region65: #{tpu_custom_call.1} parent=1 // pred_fallthru
      _
    %302 = vsyncpa [#allocation4], 1
    %303 = vsyncpa [#allocation7], 1
    %304 = vsyncpa [#allocation5], 1
    %305 = vsyncpa [#allocation11], 1

</llo_original>
